<compile_context>
chip_gen: v7x
topology: tpu7x:2x2x1
jax: 0.10.0
libtpu: 0.0.40
codegen_flags: <defaults>
</compile_context>

<pallas_src>
import math

import jax
import jax.numpy as jnp
from jax.experimental import pallas as pl
from jax.experimental.pallas import tpu as pltpu

LANE = 128


def _round_up(n, m):
    return ((n + m - 1) // m) * m


def _cdiv(a, b):
    return -(-a // b)


# ---------------------------------------------------------------------------
# Kernel: the whole (small) MLP fused in one grid step over a batch tile.
# ---------------------------------------------------------------------------
def mlp_kernel(x_ref, w1_ref, wpack_ref, bpack_ref, o_ref):
    b = bpack_ref[...]                                   # (4, Hp) f32 biases
    x = x_ref[...]                                       # (TB, D) bf16

    h = jnp.dot(x, w1_ref[...], preferred_element_type=jnp.float32) + b[0:1, :]
    h = jnp.maximum(h, 0.0)

    h = jnp.dot(h.astype(jnp.bfloat16), wpack_ref[0],
                preferred_element_type=jnp.float32) + b[1:2, :]
    h = jnp.maximum(h, 0.0)

    h = jnp.dot(h.astype(jnp.bfloat16), wpack_ref[1],
                preferred_element_type=jnp.float32) + b[2:3, :]
    h = jnp.maximum(h, 0.0)

    out = jnp.dot(h.astype(jnp.bfloat16), wpack_ref[2],
                  preferred_element_type=jnp.float32) + b[3:4, :]
    o_ref[...] = out.astype(o_ref.dtype)                 # bf16 lane-dense store


# ---------------------------------------------------------------------------
# Wrapper: picks the batch tile, pads, builds the batch grid, slices back.
# ---------------------------------------------------------------------------
def mlp_forward(x, packed_params, out_dim, *, tb=2048):
    w1p, wpack, bpack = packed_params
    B, D = x.shape
    Hp = wpack.shape[-1]                                 # lane-padded width (128)

    # --- Tile selection -----------------------------------------------------
    # * multiple of 16 (bf16 native sublane tile),
    # * derived from B (avoid up-to-(TB-16)-row zero padding),
    # * >= 2 grid steps whenever B allows, so the "parallel" batch axis can be
    #   sharded across v7x's two TensorCores.
    B16 = _round_up(max(B, 16), 16)
    n_tiles = max(_cdiv(B16, tb), 1)
    if B16 >= 32:
        n_tiles = max(n_tiles, 2)
    TB = _round_up(_cdiv(B16, n_tiles), 16)
    B_pad = _round_up(B16, TB)

    if B_pad != B:
        x = jnp.pad(x, ((0, B_pad - B), (0, 0)))
    x = x.astype(jnp.bfloat16)                           # halve x DMA bytes

    grid = (B_pad // TB,)

    flops = 2 * B_pad * (D * Hp + 3 * Hp * Hp)
    bytes_accessed = (x.size * 2 + w1p.size * 2 + wpack.size * 2
                      + bpack.size * 4 + B_pad * Hp * 2)  # bf16 output

    out = pl.pallas_call(
        mlp_kernel,
        out_shape=jax.ShapeDtypeStruct((B_pad, Hp), jnp.bfloat16),
        grid_spec=pltpu.PrefetchScalarGridSpec(
            num_scalar_prefetch=0,
            grid=grid,
            in_specs=[
                pl.BlockSpec((TB, D), lambda i: (i, 0)),          # batch-tiled x
                pl.BlockSpec(w1p.shape, lambda i: (0, 0)),        # resident weights
                pl.BlockSpec(wpack.shape, lambda i: (0, 0, 0)),
                pl.BlockSpec(bpack.shape, lambda i: (0, 0)),
            ],
            out_specs=pl.BlockSpec((TB, Hp), lambda i: (i, 0)),   # lane-dense out
        ),
        compiler_params=pltpu.CompilerParams(
            dimension_semantics=("parallel",)),
        cost_estimate=pl.CostEstimate(flops=flops, transcendentals=0,
                                      bytes_accessed=bytes_accessed),
    )(x, w1p, wpack, bpack)

    return out[:B, :out_dim].astype(jnp.float32)


# ---------------------------------------------------------------------------
# Parameter init (matches PyTorch nn.Linear default) and lane-dense packing.
# ---------------------------------------------------------------------------
def init_params(key, input_dim, output_dim, first_factor, second_factor):
    h1 = input_dim * first_factor
    h2 = input_dim * second_factor

    def init_linear(k, fan_in, fan_out):
        kw, kb = jax.random.split(k)
        bound = 1.0 / math.sqrt(fan_in)
        w = jax.random.uniform(kw, (fan_in, fan_out), jnp.float32, -bound, bound)
        b = jax.random.uniform(kb, (fan_out,), jnp.float32, -bound, bound)
        return w, b

    k1, k2, k3, k4 = jax.random.split(key, 4)
    w1, b1 = init_linear(k1, input_dim, h1)
    w2, b2 = init_linear(k2, h1, h1)
    w3, b3 = init_linear(k3, h1, h2)
    w4, b4 = init_linear(k4, h2, output_dim)
    return (w1, b1, w2, b2, w3, b3, w4, b4), (h1, h2)


def pack_params(params):
    """Pad every hidden/output width to a multiple of 128 lanes (zeros are exact:
    padded activations stay 0 through bias+ReLU and contribute nothing downstream),
    stack the three square weights and the four biases into single buffers."""
    w1, b1, w2, b2, w3, b3, w4, b4 = params
    d = w1.shape[0]
    Hp = _round_up(max(w1.shape[1], w3.shape[1], w4.shape[1], LANE), LANE)

    def pad_w(w, rows, cols):
        return jnp.pad(w, ((0, rows - w.shape[0]), (0, cols - w.shape[1])))

    def pad_b(b):
        return jnp.pad(b, (0, Hp - b.shape[0]))

    w1p = pad_w(w1, d, Hp).astype(jnp.bfloat16)                       # (D, Hp)
    wpack = jnp.stack([pad_w(w2, Hp, Hp), pad_w(w3, Hp, Hp),
                       pad_w(w4, Hp, Hp)]).astype(jnp.bfloat16)       # (3, Hp, Hp)
    bpack = jnp.stack([pad_b(b1), pad_b(b2),
                       pad_b(b3), pad_b(b4)]).astype(jnp.float32)     # (4, Hp)
    return w1p, wpack, bpack


# Reference that mirrors the kernel's math exactly: bf16 MXU operands,
# f32 accumulation, bf16 output store.
def ref_forward_bf16(x, w1p, wpack, bpack, out_dim):
    h = jnp.dot(x.astype(jnp.bfloat16), w1p,
                preferred_element_type=jnp.float32) + bpack[0]
    h = jnp.maximum(h, 0.0)
    for l in range(3):
        h = jnp.dot(h.astype(jnp.bfloat16), wpack[l],
                    preferred_element_type=jnp.float32) + bpack[l + 1]
        if l < 2:
            h = jnp.maximum(h, 0.0)
    h = h.astype(jnp.bfloat16).astype(jnp.float32)        # kernel's output cast
    return h[:, :out_dim]


def ref_forward_f32(x, params):
    w1, b1, w2, b2, w3, b3, w4, b4 = params
    h = x
    for (w, b) in ((w1, b1), (w2, b2), (w3, b3)):
        h = jnp.maximum(h @ w + b, 0.0)
    return h @ w4 + b4


if __name__ == "__main__":
    # Module hyperparameters (small, consistent with the PyTorch __init__).
    input_dim = 32
    first_hidden_layer_factor = 4      # hidden_layer_size        = 128
    second_hidden_layer_factor = 2     # second_hidden_layer_size = 64
    output_dim = 8
    batch = 16

    key = jax.random.PRNGKey(0)
    kx, kp, kx2 = jax.random.split(key, 3)
    x = jax.random.normal(kx, (batch, input_dim), jnp.float32)

    params, (h1, h2) = init_params(kp, input_dim, output_dim,
                                   first_hidden_layer_factor,
                                   second_hidden_layer_factor)
    packed = pack_params(params)
    w1p, wpack, bpack = packed

    # --- small batch (single grid step) --------------------------------------
    out = mlp_forward(x, packed, output_dim)
    out = jax.block_until_ready(out)
    assert out.shape == (batch, output_dim)

    ref_mirror = ref_forward_bf16(x, w1p, wpack, bpack, output_dim)
    assert jnp.allclose(out, ref_mirror, atol=1e-3, rtol=1e-3)

    ref = ref_forward_f32(x, params)
    assert jnp.allclose(out, ref, atol=5e-2, rtol=5e-2)

    # --- larger, non-multiple batch (multi-step grid + padding path) ---------
    batch2 = 200
    x2 = jax.random.normal(kx2, (batch2, input_dim), jnp.float32)
    out2 = jax.block_until_ready(mlp_forward(x2, packed, output_dim))
    assert out2.shape == (batch2, output_dim)
    ref2_mirror = ref_forward_bf16(x2, w1p, wpack, bpack, output_dim)
    assert jnp.allclose(out2, ref2_mirror, atol=1e-3, rtol=1e-3)
    assert jnp.allclose(out2, ref_forward_f32(x2, params), atol=5e-2, rtol=5e-2)

    print("KERNEL_OK")
</pallas_src>

<mosaic_0001>
module attributes {stable_mosaic.version = 11 : i64} {
  func.func @mlp_kernel(%arg0: i32, %arg1: memref<16x32xbf16, #tpu.memory_space<vmem>>, %arg2: memref<32x128xbf16, #tpu.memory_space<vmem>>, %arg3: memref<3x128x128xbf16, #tpu.memory_space<vmem>>, %arg4: memref<4x128xf32, #tpu.memory_space<vmem>>, %arg5: memref<16x128xbf16, #tpu.memory_space<vmem>>) attributes {dimension_semantics = [#tpu.dimension_semantics<parallel>], iteration_bounds = array<i64: 1>, scalar_prefetch = 0 : i64, scratch_operands = 0 : i64, tpu.core_type = #tpu.core_type<tc>, window_params = [{transform_indices = @transform_0, window_bounds = array<i64: 16, 32>}, {pipeline_mode = #tpu.pipeline_mode<synchronous>, transform_indices = @transform_1, window_bounds = array<i64: 32, 128>}, {pipeline_mode = #tpu.pipeline_mode<synchronous>, transform_indices = @transform_2, window_bounds = array<i64: 3, 128, 128>}, {pipeline_mode = #tpu.pipeline_mode<synchronous>, transform_indices = @transform_3, window_bounds = array<i64: 4, 128>}, {transform_indices = @transform_4, window_bounds = array<i64: 16, 128>}]} {
    %c0 = arith.constant 0 : index
    %c0_0 = arith.constant 0 : index
    %0 = vector.load %arg4[%c0, %c0_0] : memref<4x128xf32, #tpu.memory_space<vmem>>, vector<4x128xf32>
    %c0_1 = arith.constant 0 : index
    %c0_2 = arith.constant 0 : index
    %1 = vector.load %arg1[%c0_1, %c0_2] : memref<16x32xbf16, #tpu.memory_space<vmem>>, vector<16x32xbf16>
    %c0_3 = arith.constant 0 : index
    %c0_4 = arith.constant 0 : index
    %2 = vector.load %arg2[%c0_3, %c0_4] : memref<32x128xbf16, #tpu.memory_space<vmem>>, vector<32x128xbf16>
    %cst = arith.constant dense<0.000000e+00> : vector<16x128xf32>
    %3 = tpu.matmul %1, %2, %cst {dimension_numbers = #tpu.dot_dimension_numbers<[1], [0], [0], [1], [0, 0, 1, 1], [], []>} : vector<16x32xbf16>, vector<32x128xbf16>, vector<16x128xf32> -> vector<16x128xf32>
    %4 = vector.extract_strided_slice %0 {offsets = [0, 0], sizes = [1, 128], strides = [1, 1]} : vector<4x128xf32> to vector<1x128xf32>
    %5 = vector.broadcast %4 : vector<1x128xf32> to vector<16x128xf32>
    %6 = arith.addf %3, %5 : vector<16x128xf32>
    %cst_5 = arith.constant 0.000000e+00 : f32
    %7 = vector.broadcast %cst_5 : f32 to vector<16x128xf32>
    %8 = arith.maximumf %6, %7 : vector<16x128xf32>
    %9 = arith.truncf %8 : vector<16x128xf32> to vector<16x128xbf16>
    %c0_6 = arith.constant 0 : index
    %c0_7 = arith.constant 0 : index
    %c0_8 = arith.constant 0 : index
    %10 = vector.load %arg3[%c0_6, %c0_7, %c0_8] : memref<3x128x128xbf16, #tpu.memory_space<vmem>>, vector<1x128x128xbf16>
    %11 = vector.shape_cast %10 : vector<1x128x128xbf16> to vector<128x128xbf16>
    %cst_9 = arith.constant dense<0.000000e+00> : vector<16x128xf32>
    %12 = tpu.matmul %9, %11, %cst_9 {dimension_numbers = #tpu.dot_dimension_numbers<[1], [0], [0], [1], [0, 0, 1, 1], [], []>} : vector<16x128xbf16>, vector<128x128xbf16>, vector<16x128xf32> -> vector<16x128xf32>
    %13 = vector.extract_strided_slice %0 {offsets = [1, 0], sizes = [1, 128], strides = [1, 1]} : vector<4x128xf32> to vector<1x128xf32>
    %14 = vector.broadcast %13 : vector<1x128xf32> to vector<16x128xf32>
    %15 = arith.addf %12, %14 : vector<16x128xf32>
    %cst_10 = arith.constant 0.000000e+00 : f32
    %16 = vector.broadcast %cst_10 : f32 to vector<16x128xf32>
    %17 = arith.maximumf %15, %16 : vector<16x128xf32>
    %18 = arith.truncf %17 : vector<16x128xf32> to vector<16x128xbf16>
    %c1 = arith.constant 1 : index
    %c0_11 = arith.constant 0 : index
    %c0_12 = arith.constant 0 : index
    %19 = vector.load %arg3[%c1, %c0_11, %c0_12] : memref<3x128x128xbf16, #tpu.memory_space<vmem>>, vector<1x128x128xbf16>
    %20 = vector.shape_cast %19 : vector<1x128x128xbf16> to vector<128x128xbf16>
    %cst_13 = arith.constant dense<0.000000e+00> : vector<16x128xf32>
    %21 = tpu.matmul %18, %20, %cst_13 {dimension_numbers = #tpu.dot_dimension_numbers<[1], [0], [0], [1], [0, 0, 1, 1], [], []>} : vector<16x128xbf16>, vector<128x128xbf16>, vector<16x128xf32> -> vector<16x128xf32>
    %22 = vector.extract_strided_slice %0 {offsets = [2, 0], sizes = [1, 128], strides = [1, 1]} : vector<4x128xf32> to vector<1x128xf32>
    %23 = vector.broadcast %22 : vector<1x128xf32> to vector<16x128xf32>
    %24 = arith.addf %21, %23 : vector<16x128xf32>
    %cst_14 = arith.constant 0.000000e+00 : f32
    %25 = vector.broadcast %cst_14 : f32 to vector<16x128xf32>
    %26 = arith.maximumf %24, %25 : vector<16x128xf32>
    %27 = arith.truncf %26 : vector<16x128xf32> to vector<16x128xbf16>
    %c2 = arith.constant 2 : index
    %c0_15 = arith.constant 0 : index
    %c0_16 = arith.constant 0 : index
    %28 = vector.load %arg3[%c2, %c0_15, %c0_16] : memref<3x128x128xbf16, #tpu.memory_space<vmem>>, vector<1x128x128xbf16>
    %29 = vector.shape_cast %28 : vector<1x128x128xbf16> to vector<128x128xbf16>
    %cst_17 = arith.constant dense<0.000000e+00> : vector<16x128xf32>
    %30 = tpu.matmul %27, %29, %cst_17 {dimension_numbers = #tpu.dot_dimension_numbers<[1], [0], [0], [1], [0, 0, 1, 1], [], []>} : vector<16x128xbf16>, vector<128x128xbf16>, vector<16x128xf32> -> vector<16x128xf32>
    %31 = vector.extract_strided_slice %0 {offsets = [3, 0], sizes = [1, 128], strides = [1, 1]} : vector<4x128xf32> to vector<1x128xf32>
    %32 = vector.broadcast %31 : vector<1x128xf32> to vector<16x128xf32>
    %33 = arith.addf %30, %32 : vector<16x128xf32>
    %34 = arith.truncf %33 : vector<16x128xf32> to vector<16x128xbf16>
    %c0_18 = arith.constant 0 : index
    %c0_19 = arith.constant 0 : index
    %35 = vector.load %arg5[%c0_18, %c0_19] : memref<16x128xbf16, #tpu.memory_space<vmem>>, vector<16x128xbf16>
    tpu.vector_store %arg5[%c0_18, %c0_19], %34 {strides = array<i32>} : memref<16x128xbf16, #tpu.memory_space<vmem>>, vector<16x128xbf16>,
    return
  }
  func.func @transform_0(%arg0: i32) -> (i32, i32) {
    %c0_i32 = arith.constant 0 : i32
    %c0_i32_0 = arith.constant 0 : i32
    return %arg0, %c0_i32 : i32, i32
  }
  func.func @transform_1(%arg0: i32) -> (i32, i32) {
    %c0_i32 = arith.constant 0 : i32
    %c0_i32_0 = arith.constant 0 : i32
    %c0_i32_1 = arith.constant 0 : i32
    return %c0_i32, %c0_i32_0 : i32, i32
  }
  func.func @transform_2(%arg0: i32) -> (i32, i32, i32) {
    %c0_i32 = arith.constant 0 : i32
    %c0_i32_0 = arith.constant 0 : i32
    %c0_i32_1 = arith.constant 0 : i32
    %c0_i32_2 = arith.constant 0 : i32
    return %c0_i32, %c0_i32_0, %c0_i32_1 : i32, i32, i32
  }
  func.func @transform_3(%arg0: i32) -> (i32, i32) {
    %c0_i32 = arith.constant 0 : i32
    %c0_i32_0 = arith.constant 0 : i32
    %c0_i32_1 = arith.constant 0 : i32
    return %c0_i32, %c0_i32_0 : i32, i32
  }
  func.func @transform_4(%arg0: i32) -> (i32, i32) {
    %c0_i32 = arith.constant 0 : i32
    %c0_i32_0 = arith.constant 0 : i32
    return %arg0, %c0_i32 : i32, i32
  }
}

</mosaic_0001>

<llo_original>
// kernel: tpu_custom_call.1
$region0: #{tpu_custom_call.1}
  #allocation0 [shape = 'u32[]', space=smem, size = 0x4, offset = 0x4, fixed_abs, tag = 'smem constant byte address 0x4 - core index']
  #allocation1 [shape = 'u32[144,128]{1,0:T(1,128)}', space=vmem, size = 0x12000, scoped, tag = 'internal scratch']
  %s0 = inlined_call_operand.hbm [shape: bf16[16,32], index: 0, kind: input, shape index: {}]
  %s1 = inlined_call_operand.hbm [shape: bf16[32,128], index: 1, kind: input, shape index: {}]
  %s2 = inlined_call_operand.hbm [shape: bf16[3,128,128], index: 2, kind: input, shape index: {}]
  %s3 = inlined_call_operand.vmem [shape: f32[4,128], index: 3, kind: input, shape index: {}]
  %s4 = inlined_call_operand.hbm [shape: bf16[16,128], index: 4, kind: output, shape index: {}]
  %s5 = sld [smem:[#allocation0]]
  $region38: #{tpu_custom_call.1} parent=0
    _
  %s7 = ssub.s32 1, %s5
  %s8 = scalar_select 0, %s7, %s5
  $region1: #{tpu_custom_call.1} parent=0
    #allocation2 [shape = 'u8[4096]{0}', space=vmem, size = 0x1000, scoped, tag = 'input window, operand 0, single buffered']
    #allocation3 [shape = 's32[1]{0}', space=sflag, size = 0x4, scoped, tag = 'scoped memory for tpu_custom_call.1']
    #allocation4 [shape = 's32[1]{0}', space=sflag, size = 0x4, scoped, tag = 'scoped memory for tpu_custom_call.1']
    #allocation5 [shape = 'u8[8192]{0}', space=vmem, size = 0x2000, scoped, tag = 'input window, operand 1, single buffered']
    #allocation6 [shape = 's32[1]{0}', space=sflag, size = 0x4, scoped, tag = 'scoped memory for tpu_custom_call.1']
    #allocation7 [shape = 'u8[98304]{0}', space=vmem, size = 0x18000, scoped, tag = 'input window, operand 2, single buffered']
    #allocation8 [shape = 'u8[4096]{0}', space=vmem, size = 0x1000, scoped, tag = 'output window, operand 0, single buffered']
    %9 = vsyncpa [#allocation3], 0
    %10 = vsyncpa [#allocation6], 0
    %11 = vsyncpa [#allocation4], 0
    // Predicated region
    $region2: #{tpu_custom_call.1} parent=1 // pred_check
      _
    $region3: #{tpu_custom_call.1} parent=1 // pred_check_branch
      %13 = sbr.rel (0) target = $region5
    $region4: #{tpu_custom_call.1} parent=1 // pred_region
      %s15 = ssub.s32 128, 128
      %16 = vsyncadd [#allocation3], %s15
      %s17 = sshll.u32 [#allocation2], 4
      %s18 = int_to_ptr.vmem [resolvable:$true] %s17
      %23 = dma.hbm_to_vmem [thread:$0]  %s0, 128, %s18, [#allocation3], 64, 64, 4
    $region5: #{tpu_custom_call.1} parent=1 // pred_fallthru
      _
    // Predicated region
    $region6: #{tpu_custom_call.1} parent=1 // pred_check
      _
    $region7: #{tpu_custom_call.1} parent=1 // pred_check_branch
      %25 = sbr.rel (0) target = $region9
    $region8: #{tpu_custom_call.1} parent=1 // pred_region
      %s27 = ssub.s32 256, 256
      %28 = vsyncadd [#allocation6], %s27
      %s29 = sshll.u32 [#allocation5], 4
      %s30 = int_to_ptr.vmem [resolvable:$true] %s29
      %35 = dma.hbm_to_vmem [thread:$0]  %s1, 256, %s30, [#allocation6], 64, 64, 4
    $region9: #{tpu_custom_call.1} parent=1 // pred_fallthru
      _
    // Predicated region
    $region10: #{tpu_custom_call.1} parent=1 // pred_check
      _
    $region11: #{tpu_custom_call.1} parent=1 // pred_check_branch
      %37 = sbr.rel (0) target = $region13
    $region12: #{tpu_custom_call.1} parent=1 // pred_region
      %s39 = ssub.s32 3072, 3072
      %40 = vsyncadd [#allocation6], %s39
      %s41 = sshll.u32 [#allocation7], 4
      %s42 = int_to_ptr.vmem [resolvable:$true] %s41
      %47 = dma.hbm_to_vmem [thread:$0]  %s2, 3072, %s42, [#allocation6], 64, 64, 4
    $region13: #{tpu_custom_call.1} parent=1 // pred_fallthru
      _
    // Predicated region
    $region14: #{tpu_custom_call.1} parent=1 // pred_check
      _
    $region15: #{tpu_custom_call.1} parent=1 // pred_check_branch
      %49 = sbr.rel (0) target = $region17
    $region16: #{tpu_custom_call.1} parent=1 // pred_region
      _
    $region17: #{tpu_custom_call.1} parent=1 // pred_fallthru
      _
    // Predicated region
    $region18: #{tpu_custom_call.1} parent=1 // pred_check
      _
    $region19: #{tpu_custom_call.1} parent=1 // pred_check_branch
      %51 = sbr.rel (0) target = $region21
    $region20: #{tpu_custom_call.1} parent=1 // pred_region
      %52 = dma.done [#allocation3], 128
    $region21: #{tpu_custom_call.1} parent=1 // pred_fallthru
      _
    // Predicated region
    $region22: #{tpu_custom_call.1} parent=1 // pred_check
      _
    $region23: #{tpu_custom_call.1} parent=1 // pred_check_branch
      %54 = sbr.rel (0) target = $region25
    $region24: #{tpu_custom_call.1} parent=1 // pred_region
      %55 = dma.done [#allocation6], 256
    $region25: #{tpu_custom_call.1} parent=1 // pred_fallthru
      _
    // Predicated region
    $region26: #{tpu_custom_call.1} parent=1 // pred_check
      _
    $region27: #{tpu_custom_call.1} parent=1 // pred_check_branch
      %57 = sbr.rel (0) target = $region29
    $region28: #{tpu_custom_call.1} parent=1 // pred_region
      %58 = dma.done [#allocation6], 3072
    $region29: #{tpu_custom_call.1} parent=1 // pred_fallthru
      _
    %v60 = vld [vmem:[%s3] sm:$0xf]
    %v61 = vld [vmem:[#allocation2] sm:$0xf]
    %v62 = vld [vmem:[#allocation2 + $0x4] sm:$0xf]
    %v63 = vld [vmem:[#allocation5] sm:$0xf]
    %v64 = vld [vmem:[#allocation5 + $0x4] sm:$0xf]
    %v65 = vld [vmem:[#allocation5 + $0x8] sm:$0xf]
    %v66 = vld [vmem:[#allocation5 + $0xc] sm:$0xf]
    %v67 = vlaneseq
    %v68 = vshrl.u32 %v67, 7
    %v69 = vsub.s32 0, %v68
    %v70 = vrot.slane %v60, %v69
    %v73 = vunpack.c.l.b16 %v61
    %v74 = vunpack.c.l.b16 %v62
    %v75 = vpack.c.b16 %v74, %v73
    %v80 = vunpack.c.l.b16 %v63
    %v81 = vunpack.c.l.b16 %v64
    %v82 = vunpack.c.l.b16 %v65
    %v83 = vunpack.c.l.b16 %v66
    %v84 = vpack.c.b16 %v81, %v80
    %v85 = vpack.c.b16 %v83, %v82
    %vm88 = vcmask 261120
    %v90 = vsel %vm88, %v75, 0
    %92 = vmatprep.subr.bf16.mxu0 0
    %93 = vmatpush1.bf16.msra.mxu0 %v84
    %94 = vmatprep.subr.bf16.mxu0 0
    %95 = vmatpush1.bf16.msra.mxu0 %v85
    %96 = vmatprep.subr.bf16.mxu0 0
    %97 = vmatpush1.bf16.msra.mxu0 0
    %98 = vmatprep.subr.bf16.mxu0 0
    %99 = vmatpush1.bf16.msra.mxu0 0
    %100 = vmatprep.subr.bf16.mxu0 0
    %101 = vmatpush1.bf16.msra.mxu0 0
    %102 = vmatprep.subr.bf16.mxu0 0
    %103 = vmatpush1.bf16.msra.mxu0 0
    %104 = vmatprep.subr.bf16.mxu0 0
    %105 = vmatpush1.bf16.msra.mxu0 0
    %106 = vmatprep.subr.bf16.mxu0 0
    %107 = vmatpush1.bf16.msra.mxu0 0
    %108 = vmatprep.subr.bf16.mxu0 0
    %109 = vmatpush1.bf16.msra.mxu0 0
    %110 = vmatprep.subr.bf16.mxu0 0
    %111 = vmatpush1.bf16.msra.mxu0 0
    %112 = vmatprep.subr.bf16.mxu0 0
    %113 = vmatpush1.bf16.msra.mxu0 0
    %114 = vmatprep.subr.bf16.mxu0 0
    %115 = vmatpush1.bf16.msra.mxu0 0
    %116 = vmatprep.subr.bf16.mxu0 0
    %117 = vmatpush1.bf16.msra.mxu0 0
    %118 = vmatprep.subr.bf16.mxu0 0
    %119 = vmatpush1.bf16.msra.mxu0 0
    %120 = vmatprep.subr.bf16.mxu0 0
    %121 = vmatpush1.bf16.msra.mxu0 0
    %122 = vmatprep.subr.bf16.mxu0 0
    %123 = vmatpush1.bf16.msra.mxu0 0
    %124 = vmatprep.mubr.bf16.mxu0 0
    %125 = vmatmul.mubr.bf16.gmra.mrb[0].mxu0 %v90
    %v126 = vpop.f32.mrb[0].mxu0
    %v127 = vadd.f32 %v70, %v126
    %v128 = vpop.f32.mrb[0].mxu0
    %v129 = vpop.f32.mrb[0].mxu0
    %v130 = vadd.f32 %v70, %v129
    %v131 = vpop.f32.mrb[0].mxu0
    %132 = vdwg.mxu0
    %v133 = vmax.f32 %v127, 0.0
    %v134 = vmax.f32 %v130, 0.0
    %v135 = vpack.c.bf16 %v134, %v133
    %v136 = vld [vmem:[#allocation7] sm:$0xf]
    %v137 = vld [vmem:[#allocation7 + $0x4] sm:$0xf]
    %v138 = vld [vmem:[#allocation7 + $0x8] sm:$0xf]
    %v139 = vld [vmem:[#allocation7 + $0xc] sm:$0xf]
    %v140 = vld [vmem:[#allocation7 + $0x10] sm:$0xf]
    %v141 = vld [vmem:[#allocation7 + $0x14] sm:$0xf]
    %v142 = vld [vmem:[#allocation7 + $0x18] sm:$0xf]
    %v143 = vld [vmem:[#allocation7 + $0x1c] sm:$0xf]
    %v144 = vld [vmem:[#allocation7 + $0x20] sm:$0xf]
    %v145 = vld [vmem:[#allocation7 + $0x24] sm:$0xf]
    %v146 = vld [vmem:[#allocation7 + $0x28] sm:$0xf]
    %v147 = vld [vmem:[#allocation7 + $0x2c] sm:$0xf]
    %v148 = vld [vmem:[#allocation7 + $0x30] sm:$0xf]
    %v149 = vld [vmem:[#allocation7 + $0x34] sm:$0xf]
    %v150 = vld [vmem:[#allocation7 + $0x38] sm:$0xf]
    %v151 = vld [vmem:[#allocation7 + $0x3c] sm:$0xf]
    %v152 = vlaneseq
    %v153 = vshrl.u32 %v152, 7
    %v154 = vsub.s32 1, %v153
    %v155 = vrot.slane %v60, %v154
    %v172 = vunpack.c.l.b16 %v136
    %v173 = vunpack.c.l.b16 %v137
    %v174 = vunpack.c.l.b16 %v138
    %v175 = vunpack.c.l.b16 %v139
    %v176 = vunpack.c.l.b16 %v140
    %v177 = vunpack.c.l.b16 %v141
    %v178 = vunpack.c.l.b16 %v142
    %v179 = vunpack.c.l.b16 %v143
    %v180 = vunpack.c.l.b16 %v144
    %v181 = vunpack.c.l.b16 %v145
    %v182 = vunpack.c.l.b16 %v146
    %v183 = vunpack.c.l.b16 %v147
    %v184 = vunpack.c.l.b16 %v148
    %v185 = vunpack.c.l.b16 %v149
    %v186 = vunpack.c.l.b16 %v150
    %v187 = vunpack.c.l.b16 %v151
    %v188 = vpack.c.b16 %v173, %v172
    %v189 = vpack.c.b16 %v175, %v174
    %v190 = vpack.c.b16 %v177, %v176
    %v191 = vpack.c.b16 %v179, %v178
    %v192 = vpack.c.b16 %v181, %v180
    %v193 = vpack.c.b16 %v183, %v182
    %v194 = vpack.c.b16 %v185, %v184
    %v195 = vpack.c.b16 %v187, %v186
    %204 = vmatprep.subr.bf16.mxu0 0
    %205 = vmatpush1.bf16.msra.mxu0 %v188
    %206 = vmatprep.subr.bf16.mxu0 0
    %207 = vmatpush1.bf16.msra.mxu0 %v189
    %208 = vmatprep.subr.bf16.mxu0 0
    %209 = vmatpush1.bf16.msra.mxu0 %v190
    %210 = vmatprep.subr.bf16.mxu0 0
    %211 = vmatpush1.bf16.msra.mxu0 %v191
    %212 = vmatprep.subr.bf16.mxu0 0
    %213 = vmatpush1.bf16.msra.mxu0 %v192
    %214 = vmatprep.subr.bf16.mxu0 0
    %215 = vmatpush1.bf16.msra.mxu0 %v193
    %216 = vmatprep.subr.bf16.mxu0 0
    %217 = vmatpush1.bf16.msra.mxu0 %v194
    %218 = vmatprep.subr.bf16.mxu0 0
    %219 = vmatpush1.bf16.msra.mxu0 %v195
    %220 = vmatprep.subr.bf16.mxu0 0
    %221 = vmatpush1.bf16.msra.mxu0 0
    %222 = vmatprep.subr.bf16.mxu0 0
    %223 = vmatpush1.bf16.msra.mxu0 0
    %224 = vmatprep.subr.bf16.mxu0 0
    %225 = vmatpush1.bf16.msra.mxu0 0
    %226 = vmatprep.subr.bf16.mxu0 0
    %227 = vmatpush1.bf16.msra.mxu0 0
    %228 = vmatprep.subr.bf16.mxu0 0
    %229 = vmatpush1.bf16.msra.mxu0 0
    %230 = vmatprep.subr.bf16.mxu0 0
    %231 = vmatpush1.bf16.msra.mxu0 0
    %232 = vmatprep.subr.bf16.mxu0 0
    %233 = vmatpush1.bf16.msra.mxu0 0
    %234 = vmatprep.subr.bf16.mxu0 0
    %235 = vmatpush1.bf16.msra.mxu0 0
    %236 = vmatprep.mubr.bf16.mxu0 0
    %237 = vmatmul.mubr.bf16.gmra.mrb[0].mxu0 %v135
    %v238 = vpop.f32.mrb[0].mxu0
    %v239 = vadd.f32 %v155, %v238
    %v240 = vpop.f32.mrb[0].mxu0
    %v241 = vpop.f32.mrb[0].mxu0
    %v242 = vadd.f32 %v155, %v241
    %v243 = vpop.f32.mrb[0].mxu0
    %244 = vdwg.mxu0
    %v245 = vmax.f32 %v239, 0.0
    %v246 = vmax.f32 %v242, 0.0
    %v247 = vpack.c.bf16 %v246, %v245
    %s248 = scalar_lea.vmem [#allocation7], 64
    %v249 = vld [vmem:[%s248] sm:$0xf]
    %v250 = vld [vmem:[%s248 + $0x4] sm:$0xf]
    %v251 = vld [vmem:[%s248 + $0x8] sm:$0xf]
    %v252 = vld [vmem:[%s248 + $0xc] sm:$0xf]
    %v253 = vld [vmem:[%s248 + $0x10] sm:$0xf]
    %v254 = vld [vmem:[%s248 + $0x14] sm:$0xf]
    %v255 = vld [vmem:[%s248 + $0x18] sm:$0xf]
    %v256 = vld [vmem:[%s248 + $0x1c] sm:$0xf]
    %v257 = vld [vmem:[%s248 + $0x20] sm:$0xf]
    %v258 = vld [vmem:[%s248 + $0x24] sm:$0xf]
    %v259 = vld [vmem:[%s248 + $0x28] sm:$0xf]
    %v260 = vld [vmem:[%s248 + $0x2c] sm:$0xf]
    %v261 = vld [vmem:[%s248 + $0x30] sm:$0xf]
    %v262 = vld [vmem:[%s248 + $0x34] sm:$0xf]
    %v263 = vld [vmem:[%s248 + $0x38] sm:$0xf]
    %v264 = vld [vmem:[%s248 + $0x3c] sm:$0xf]
    %v265 = vlaneseq
    %v266 = vshrl.u32 %v265, 7
    %v267 = vsub.s32 2, %v266
    %v268 = vrot.slane %v60, %v267
    %v285 = vunpack.c.l.b16 %v249
    %v286 = vunpack.c.l.b16 %v250
    %v287 = vunpack.c.l.b16 %v251
    %v288 = vunpack.c.l.b16 %v252
    %v289 = vunpack.c.l.b16 %v253
    %v290 = vunpack.c.l.b16 %v254
    %v291 = vunpack.c.l.b16 %v255
    %v292 = vunpack.c.l.b16 %v256
    %v293 = vunpack.c.l.b16 %v257
    %v294 = vunpack.c.l.b16 %v258
    %v295 = vunpack.c.l.b16 %v259
    %v296 = vunpack.c.l.b16 %v260
    %v297 = vunpack.c.l.b16 %v261
    %v298 = vunpack.c.l.b16 %v262
    %v299 = vunpack.c.l.b16 %v263
    %v300 = vunpack.c.l.b16 %v264
    %v301 = vpack.c.b16 %v286, %v285
    %v302 = vpack.c.b16 %v288, %v287
    %v303 = vpack.c.b16 %v290, %v289
    %v304 = vpack.c.b16 %v292, %v291
    %v305 = vpack.c.b16 %v294, %v293
    %v306 = vpack.c.b16 %v296, %v295
    %v307 = vpack.c.b16 %v298, %v297
    %v308 = vpack.c.b16 %v300, %v299
    %317 = vmatprep.subr.bf16.mxu0 0
    %318 = vmatpush1.bf16.msra.mxu0 %v301
    %319 = vmatprep.subr.bf16.mxu0 0
    %320 = vmatpush1.bf16.msra.mxu0 %v302
    %321 = vmatprep.subr.bf16.mxu0 0
    %322 = vmatpush1.bf16.msra.mxu0 %v303
    %323 = vmatprep.subr.bf16.mxu0 0
    %324 = vmatpush1.bf16.msra.mxu0 %v304
    %325 = vmatprep.subr.bf16.mxu0 0
    %326 = vmatpush1.bf16.msra.mxu0 %v305
    %327 = vmatprep.subr.bf16.mxu0 0
    %328 = vmatpush1.bf16.msra.mxu0 %v306
    %329 = vmatprep.subr.bf16.mxu0 0
    %330 = vmatpush1.bf16.msra.mxu0 %v307
    %331 = vmatprep.subr.bf16.mxu0 0
    %332 = vmatpush1.bf16.msra.mxu0 %v308
    %333 = vmatprep.subr.bf16.mxu0 0
    %334 = vmatpush1.bf16.msra.mxu0 0
    %335 = vmatprep.subr.bf16.mxu0 0
    %336 = vmatpush1.bf16.msra.mxu0 0
    %337 = vmatprep.subr.bf16.mxu0 0
    %338 = vmatpush1.bf16.msra.mxu0 0
    %339 = vmatprep.subr.bf16.mxu0 0
    %340 = vmatpush1.bf16.msra.mxu0 0
    %341 = vmatprep.subr.bf16.mxu0 0
    %342 = vmatpush1.bf16.msra.mxu0 0
    %343 = vmatprep.subr.bf16.mxu0 0
    %344 = vmatpush1.bf16.msra.mxu0 0
    %345 = vmatprep.subr.bf16.mxu0 0
    %346 = vmatpush1.bf16.msra.mxu0 0
    %347 = vmatprep.subr.bf16.mxu0 0
    %348 = vmatpush1.bf16.msra.mxu0 0
    %349 = vmatprep.mubr.bf16.mxu0 0
    %350 = vmatmul.mubr.bf16.gmra.mrb[0].mxu0 %v247
    %v351 = vpop.f32.mrb[0].mxu0
    %v352 = vadd.f32 %v268, %v351
    %v353 = vpop.f32.mrb[0].mxu0
    %v354 = vpop.f32.mrb[0].mxu0
    %v355 = vadd.f32 %v268, %v354
    %v356 = vpop.f32.mrb[0].mxu0
    %357 = vdwg.mxu0
    %v358 = vmax.f32 %v352, 0.0
    %v359 = vmax.f32 %v355, 0.0
    %v360 = vpack.c.bf16 %v359, %v358
    %s361 = scalar_lea.vmem [#allocation7], 128
    %v362 = vld [vmem:[%s361] sm:$0xf]
    %v363 = vld [vmem:[%s361 + $0x4] sm:$0xf]
    %v364 = vld [vmem:[%s361 + $0x8] sm:$0xf]
    %v365 = vld [vmem:[%s361 + $0xc] sm:$0xf]
    %v366 = vld [vmem:[%s361 + $0x10] sm:$0xf]
    %v367 = vld [vmem:[%s361 + $0x14] sm:$0xf]
    %v368 = vld [vmem:[%s361 + $0x18] sm:$0xf]
    %v369 = vld [vmem:[%s361 + $0x1c] sm:$0xf]
    %v370 = vld [vmem:[%s361 + $0x20] sm:$0xf]
    %v371 = vld [vmem:[%s361 + $0x24] sm:$0xf]
    %v372 = vld [vmem:[%s361 + $0x28] sm:$0xf]
    %v373 = vld [vmem:[%s361 + $0x2c] sm:$0xf]
    %v374 = vld [vmem:[%s361 + $0x30] sm:$0xf]
    %v375 = vld [vmem:[%s361 + $0x34] sm:$0xf]
    %v376 = vld [vmem:[%s361 + $0x38] sm:$0xf]
    %v377 = vld [vmem:[%s361 + $0x3c] sm:$0xf]
    %v378 = vlaneseq
    %v379 = vshrl.u32 %v378, 7
    %v380 = vsub.s32 3, %v379
    %v381 = vrot.slane %v60, %v380
    %v398 = vunpack.c.l.b16 %v362
    %v399 = vunpack.c.l.b16 %v363
    %v400 = vunpack.c.l.b16 %v364
    %v401 = vunpack.c.l.b16 %v365
    %v402 = vunpack.c.l.b16 %v366
    %v403 = vunpack.c.l.b16 %v367
    %v404 = vunpack.c.l.b16 %v368
    %v405 = vunpack.c.l.b16 %v369
    %v406 = vunpack.c.l.b16 %v370
    %v407 = vunpack.c.l.b16 %v371
    %v408 = vunpack.c.l.b16 %v372
    %v409 = vunpack.c.l.b16 %v373
    %v410 = vunpack.c.l.b16 %v374
    %v411 = vunpack.c.l.b16 %v375
    %v412 = vunpack.c.l.b16 %v376
    %v413 = vunpack.c.l.b16 %v377
    %v414 = vpack.c.b16 %v399, %v398
    %v415 = vpack.c.b16 %v401, %v400
    %v416 = vpack.c.b16 %v403, %v402
    %v417 = vpack.c.b16 %v405, %v404
    %v418 = vpack.c.b16 %v407, %v406
    %v419 = vpack.c.b16 %v409, %v408
    %v420 = vpack.c.b16 %v411, %v410
    %v421 = vpack.c.b16 %v413, %v412
    %430 = vmatprep.subr.bf16.mxu0 0
    %431 = vmatpush1.bf16.msra.mxu0 %v414
    %432 = vmatprep.subr.bf16.mxu0 0
    %433 = vmatpush1.bf16.msra.mxu0 %v415
    %434 = vmatprep.subr.bf16.mxu0 0
    %435 = vmatpush1.bf16.msra.mxu0 %v416
    %436 = vmatprep.subr.bf16.mxu0 0
    %437 = vmatpush1.bf16.msra.mxu0 %v417
    %438 = vmatprep.subr.bf16.mxu0 0
    %439 = vmatpush1.bf16.msra.mxu0 %v418
    %440 = vmatprep.subr.bf16.mxu0 0
    %441 = vmatpush1.bf16.msra.mxu0 %v419
    %442 = vmatprep.subr.bf16.mxu0 0
    %443 = vmatpush1.bf16.msra.mxu0 %v420
    %444 = vmatprep.subr.bf16.mxu0 0
    %445 = vmatpush1.bf16.msra.mxu0 %v421
    %446 = vmatprep.subr.bf16.mxu0 0
    %447 = vmatpush1.bf16.msra.mxu0 0
    %448 = vmatprep.subr.bf16.mxu0 0
    %449 = vmatpush1.bf16.msra.mxu0 0
    %450 = vmatprep.subr.bf16.mxu0 0
    %451 = vmatpush1.bf16.msra.mxu0 0
    %452 = vmatprep.subr.bf16.mxu0 0
    %453 = vmatpush1.bf16.msra.mxu0 0
    %454 = vmatprep.subr.bf16.mxu0 0
    %455 = vmatpush1.bf16.msra.mxu0 0
    %456 = vmatprep.subr.bf16.mxu0 0
    %457 = vmatpush1.bf16.msra.mxu0 0
    %458 = vmatprep.subr.bf16.mxu0 0
    %459 = vmatpush1.bf16.msra.mxu0 0
    %460 = vmatprep.subr.bf16.mxu0 0
    %461 = vmatpush1.bf16.msra.mxu0 0
    %462 = vmatprep.mubr.bf16.mxu0 0
    %463 = vmatmul.mubr.bf16.gmra.mrb[0].mxu0 %v360
    %v464 = vpop.f32.mrb[0].mxu0
    %v465 = vadd.f32 %v381, %v464
    %v466 = vpop.f32.mrb[0].mxu0
    %v467 = vpop.f32.mrb[0].mxu0
    %v468 = vadd.f32 %v381, %v467
    %v469 = vpop.f32.mrb[0].mxu0
    %470 = vdwg.mxu0
    %v471 = vpack.c.bf16 %v468, %v465
    %v473 = vunpack.c.l.b16 %v471
    %v474 = vunpack.c.h.b16 %v471
    %v475 = vpack.c.b16 %v473, %v473
    %v476 = vpack.c.b16 %v474, %v474
    %479 = vst [vmem:[#allocation8] sm:$0xf] %v475
    %480 = vst [vmem:[#allocation8 + $0x4] sm:$0xf] %v476
    // Predicated region
    $region30: #{tpu_custom_call.1} parent=1 // pred_check
      _
    $region31: #{tpu_custom_call.1} parent=1 // pred_check_branch
      %482 = sbr.rel (0) target = $region33
    $region32: #{tpu_custom_call.1} parent=1 // pred_region
      %s484 = ssub.s32 128, 128
      %485 = vsyncadd [#allocation4], %s484
      %s486 = sshll.u32 [#allocation8], 4
      %s487 = int_to_ptr.vmem [resolvable:$true] %s486
      %492 = dma.vmem_to_hbm [thread:$0]  %s487, 128, %s4, [#allocation4], 64, 64, 4
    $region33: #{tpu_custom_call.1} parent=1 // pred_fallthru
      _
    // Predicated region
    $region34: #{tpu_custom_call.1} parent=1 // pred_check
      _
    $region35: #{tpu_custom_call.1} parent=1 // pred_check_branch
      %494 = sbr.rel (0) target = $region37
    $region36: #{tpu_custom_call.1} parent=1 // pred_region
      %495 = dma.done [#allocation4], 128
    $region37: #{tpu_custom_call.1} parent=1 // pred_fallthru
      _
    %496 = vsyncpa [#allocation3], 1
    %497 = vsyncpa [#allocation6], 1
    %498 = vsyncpa [#allocation4], 1

</llo_original>
